<compile_context>
chip_gen: v7x
topology: tpu7x:2x2x1
jax: 0.10.0
libtpu: 0.0.40
codegen_flags: <defaults>
</compile_context>

<pallas_src>
import functools

import jax
import jax.numpy as jnp
from jax import lax
from jax.experimental import pallas as pl
from jax.experimental.pallas import tpu as pltpu

_EPS_NORMALIZE = 1e-12   # F.normalize default eps
_EPS_COSINE = 1e-8       # F.cosine_similarity default eps


def _cosine_triplet_kernel(a_ref, pos_ref, neg_ref, out_ref, *,
                           p_norm, margin, batch, tile_b):
    i = pl.program_id(0)

    @pl.when(i == 0)
    def _init():
        out_ref[0] = jnp.float32(0.0)

    a = a_ref[...].astype(jnp.float32)
    q = pos_ref[...].astype(jnp.float32)
    n = neg_ref[...].astype(jnp.float32)

    def row_scale(x, sumsq):
        """Per-row scalar c such that (x * c) reproduces F.normalize(x, p) followed by
        cosine_similarity's L2 clamp on the normalized vector (1e-12 then 1e-8)."""
        l2 = jnp.sqrt(sumsq)                                   # (TB, 1)
        if p_norm == 2.0:
            lp = l2                                            # reuse reduction
        elif p_norm == 1.0:
            lp = jnp.sum(jnp.abs(x), axis=1, keepdims=True)
        else:  # exotic p: generic (slow) path
            lp = jnp.power(
                jnp.sum(jnp.power(jnp.abs(x), p_norm), axis=1, keepdims=True),
                1.0 / p_norm)
        s_norm = 1.0 / jnp.maximum(lp, _EPS_NORMALIZE)          # F.normalize scale
        s_cos = 1.0 / jnp.maximum(l2 * s_norm, _EPS_COSINE)     # cosine clamp
        return s_norm * s_cos                                   # (TB, 1)

    # Row reductions: 3 sum-of-squares + 2 dot products (all that is needed).
    ss_a = jnp.sum(a * a, axis=1, keepdims=True)
    ss_q = jnp.sum(q * q, axis=1, keepdims=True)
    ss_n = jnp.sum(n * n, axis=1, keepdims=True)
    c_a = row_scale(a, ss_a)   # anchor scale computed once, reused for both sims
    c_q = row_scale(q, ss_q)
    c_n = row_scale(n, ss_n)

    dot_pos = jnp.sum(a * q, axis=1, keepdims=True)
    dot_neg = jnp.sum(a * n, axis=1, keepdims=True)

    # Left-associated products: all-zero rows give dot == 0, which kills the large
    # clamped scale before the two scales can overflow -> similarity 0, like PyTorch.
    pos_sim = (dot_pos * c_a) * c_q
    neg_sim = (dot_neg * c_a) * c_n

    per_row = jnp.maximum(1.0 - pos_sim - (1.0 - neg_sim) + margin, 0.0)  # (TB, 1)

    if batch % tile_b != 0:
        # Mask rows of the padded last tile before accumulating.
        row_ids = i * tile_b + lax.broadcasted_iota(jnp.int32, (tile_b, 1), 0)
        per_row = jnp.where(row_ids < batch, per_row, 0.0)

    out_ref[0] += jnp.sum(per_row)

    @pl.when(i == pl.num_programs(0) - 1)
    def _finalize():
        out_ref[0] = out_ref[0] / batch


def _pick_tile_b(batch, dim, itemsize):
    """Largest batch tile such that 3 inputs x 2 pipeline buffers stay ~<=12 MiB,
    which fits scoped-VMEM defaults on v5e/v6e/v7x. Multiple of 8 when possible."""
    budget_bytes = 12 * 1024 * 1024
    per_row_bytes = 6 * dim * itemsize          # 3 inputs, double-buffered
    tb = min(budget_bytes // max(per_row_bytes, 1), 1024, batch)
    tb = int(max(tb, 1))
    if batch >= 8:
        tb = max(8, (tb // 8) * 8)
    return tb


def cosine_triplet_loss(anchor, positive, negative, p=2, margin=0.2, tile_b=None):
    """Pallas wrapper. anchor/positive/negative: (B, D). Returns scalar float32 loss."""
    assert anchor.shape == positive.shape == negative.shape
    assert anchor.ndim == 2
    B, D = anchor.shape
    if tile_b is None:
        tile_b = _pick_tile_b(B, D, jnp.dtype(anchor.dtype).itemsize)
    num_tiles = pl.cdiv(B, tile_b)

    kernel = functools.partial(
        _cosine_triplet_kernel,
        p_norm=float(p), margin=float(margin), batch=B, tile_b=tile_b)

    out = pl.pallas_call(
        kernel,
        out_shape=jax.ShapeDtypeStruct((1,), jnp.float32),
        grid=(num_tiles,),
        in_specs=[
            pl.BlockSpec((tile_b, D), lambda i: (i, 0)),
            pl.BlockSpec((tile_b, D), lambda i: (i, 0)),
            pl.BlockSpec((tile_b, D), lambda i: (i, 0)),
        ],
        out_specs=pl.BlockSpec((1,), lambda i: (0,), memory_space=pltpu.SMEM),
        compiler_params=pltpu.CompilerParams(
            dimension_semantics=("arbitrary",)),   # reduction axis (resident output)
    )(anchor, positive, negative)
    return out[0]


def _reference(anchor, positive, negative, p=2, margin=0.2):
    """Pure-JAX reference mirroring the PyTorch module exactly."""
    def norm(x):
        n = jnp.power(jnp.sum(jnp.power(jnp.abs(x), p), axis=1, keepdims=True), 1.0 / p)
        return x / jnp.maximum(n, 1e-12)

    def cos(x, y):
        xn = jnp.maximum(jnp.linalg.norm(x, axis=1, keepdims=True), 1e-8)
        yn = jnp.maximum(jnp.linalg.norm(y, axis=1, keepdims=True), 1e-8)
        return jnp.sum((x / xn) * (y / yn), axis=1)

    a, q, n = norm(anchor), norm(positive), norm(negative)
    loss = jnp.maximum(1.0 - cos(a, q) - (1.0 - cos(a, n)) + margin, 0.0)
    return jnp.mean(loss)


if __name__ == "__main__":
    key = jax.random.PRNGKey(0)

    # Case 1: small, deterministic inputs: batch=8, embedding dim=32 (single tile).
    ka, kp, kn = jax.random.split(key, 3)
    B, D = 8, 32
    anchor = jax.random.normal(ka, (B, D), dtype=jnp.float32)
    positive = jax.random.normal(kp, (B, D), dtype=jnp.float32)
    negative = jax.random.normal(kn, (B, D), dtype=jnp.float32)

    loss = cosine_triplet_loss(anchor, positive, negative, p=2, margin=0.2)
    loss = jax.block_until_ready(loss)
    ref = _reference(anchor, positive, negative, p=2, margin=0.2)
    assert jnp.allclose(loss, ref, atol=1e-5, rtol=1e-5), (loss, ref)

    # Case 2: batch not divisible by the tile -> multi-tile grid + masked last tile.
    kb = jax.random.split(key, 4)
    B2, D2 = 20, 256
    a2 = jax.random.normal(kb[0], (B2, D2), dtype=jnp.float32)
    p2 = jax.random.normal(kb[1], (B2, D2), dtype=jnp.float32)
    n2 = jax.random.normal(kb[2], (B2, D2), dtype=jnp.float32)

    loss2 = cosine_triplet_loss(a2, p2, n2, p=2, margin=0.2)
    loss2 = jax.block_until_ready(loss2)
    ref2 = _reference(a2, p2, n2, p=2, margin=0.2)
    assert jnp.allclose(loss2, ref2, atol=1e-5, rtol=1e-5), (loss2, ref2)

    print("KERNEL_OK")
</pallas_src>

<mosaic_0001>
module attributes {stable_mosaic.version = 11 : i64} {
  func.func @_cosine_triplet_kernel(%arg0: i32, %arg1: memref<8x32xf32, #tpu.memory_space<vmem>>, %arg2: memref<8x32xf32, #tpu.memory_space<vmem>>, %arg3: memref<8x32xf32, #tpu.memory_space<vmem>>, %arg4: memref<1xf32, #tpu.memory_space<smem>>) attributes {dimension_semantics = [#tpu.dimension_semantics<arbitrary>], iteration_bounds = array<i64: 1>, scalar_prefetch = 0 : i64, scratch_operands = 0 : i64, tpu.core_type = #tpu.core_type<tc>, window_params = [{transform_indices = @transform_0, window_bounds = array<i64: 8, 32>}, {transform_indices = @transform_1, window_bounds = array<i64: 8, 32>}, {transform_indices = @transform_2, window_bounds = array<i64: 8, 32>}, {transform_indices = @transform_3, window_bounds = array<i64: 1>}]} {
    %c0_i32 = arith.constant 0 : i32
    %0 = arith.cmpi eq, %arg0, %c0_i32 : i32
    %1 = arith.extui %0 : i1 to i32
    %c0_i32_0 = arith.constant 0 : i32
    %2 = arith.cmpi ne, %1, %c0_i32_0 : i32
    scf.if %2 {
      %cst_31 = arith.constant 0.000000e+00 : f32
      %c0_32 = arith.constant 0 : index
      %77 = memref.load %arg4[%c0_32] : memref<1xf32, #tpu.memory_space<smem>>
      memref.store %cst_31, %arg4[%c0_32] : memref<1xf32, #tpu.memory_space<smem>>
    } else {
    }
    %c0 = arith.constant 0 : index
    %c0_1 = arith.constant 0 : index
    %3 = vector.load %arg1[%c0, %c0_1] : memref<8x32xf32, #tpu.memory_space<vmem>>, vector<8x32xf32>
    %c0_2 = arith.constant 0 : index
    %c0_3 = arith.constant 0 : index
    %4 = vector.load %arg2[%c0_2, %c0_3] : memref<8x32xf32, #tpu.memory_space<vmem>>, vector<8x32xf32>
    %c0_4 = arith.constant 0 : index
    %c0_5 = arith.constant 0 : index
    %5 = vector.load %arg3[%c0_4, %c0_5] : memref<8x32xf32, #tpu.memory_space<vmem>>, vector<8x32xf32>
    %6 = arith.mulf %3, %3 : vector<8x32xf32>
    %cst = arith.constant dense<0.000000e+00> : vector<8xf32>
    %7 = vector.multi_reduction <add>, %6, %cst [1] : vector<8x32xf32> to vector<8xf32>
    %8 = vector.shape_cast %7 : vector<8xf32> to vector<8x1xf32>
    %9 = arith.mulf %4, %4 : vector<8x32xf32>
    %cst_6 = arith.constant dense<0.000000e+00> : vector<8xf32>
    %10 = vector.multi_reduction <add>, %9, %cst_6 [1] : vector<8x32xf32> to vector<8xf32>
    %11 = vector.shape_cast %10 : vector<8xf32> to vector<8x1xf32>
    %12 = arith.mulf %5, %5 : vector<8x32xf32>
    %cst_7 = arith.constant dense<0.000000e+00> : vector<8xf32>
    %13 = vector.multi_reduction <add>, %12, %cst_7 [1] : vector<8x32xf32> to vector<8xf32>
    %14 = vector.shape_cast %13 : vector<8xf32> to vector<8x1xf32>
    %15 = math.sqrt %8 : vector<8x1xf32>
    %cst_8 = arith.constant 9.99999996E-13 : f32
    %16 = vector.broadcast %cst_8 : f32 to vector<8x1xf32>
    %17 = arith.maximumf %15, %16 : vector<8x1xf32>
    %cst_9 = arith.constant 1.000000e+00 : f32
    %18 = vector.broadcast %cst_9 : f32 to vector<8x1xf32>
    %19 = arith.divf %18, %17 : vector<8x1xf32>
    %20 = arith.mulf %15, %19 : vector<8x1xf32>
    %cst_10 = arith.constant 9.99999993E-9 : f32
    %21 = vector.broadcast %cst_10 : f32 to vector<8x1xf32>
    %22 = arith.maximumf %20, %21 : vector<8x1xf32>
    %cst_11 = arith.constant 1.000000e+00 : f32
    %23 = vector.broadcast %cst_11 : f32 to vector<8x1xf32>
    %24 = arith.divf %23, %22 : vector<8x1xf32>
    %25 = arith.mulf %19, %24 : vector<8x1xf32>
    %26 = math.sqrt %11 : vector<8x1xf32>
    %cst_12 = arith.constant 9.99999996E-13 : f32
    %27 = vector.broadcast %cst_12 : f32 to vector<8x1xf32>
    %28 = arith.maximumf %26, %27 : vector<8x1xf32>
    %cst_13 = arith.constant 1.000000e+00 : f32
    %29 = vector.broadcast %cst_13 : f32 to vector<8x1xf32>
    %30 = arith.divf %29, %28 : vector<8x1xf32>
    %31 = arith.mulf %26, %30 : vector<8x1xf32>
    %cst_14 = arith.constant 9.99999993E-9 : f32
    %32 = vector.broadcast %cst_14 : f32 to vector<8x1xf32>
    %33 = arith.maximumf %31, %32 : vector<8x1xf32>
    %cst_15 = arith.constant 1.000000e+00 : f32
    %34 = vector.broadcast %cst_15 : f32 to vector<8x1xf32>
    %35 = arith.divf %34, %33 : vector<8x1xf32>
    %36 = arith.mulf %30, %35 : vector<8x1xf32>
    %37 = math.sqrt %14 : vector<8x1xf32>
    %cst_16 = arith.constant 9.99999996E-13 : f32
    %38 = vector.broadcast %cst_16 : f32 to vector<8x1xf32>
    %39 = arith.maximumf %37, %38 : vector<8x1xf32>
    %cst_17 = arith.constant 1.000000e+00 : f32
    %40 = vector.broadcast %cst_17 : f32 to vector<8x1xf32>
    %41 = arith.divf %40, %39 : vector<8x1xf32>
    %42 = arith.mulf %37, %41 : vector<8x1xf32>
    %cst_18 = arith.constant 9.99999993E-9 : f32
    %43 = vector.broadcast %cst_18 : f32 to vector<8x1xf32>
    %44 = arith.maximumf %42, %43 : vector<8x1xf32>
    %cst_19 = arith.constant 1.000000e+00 : f32
    %45 = vector.broadcast %cst_19 : f32 to vector<8x1xf32>
    %46 = arith.divf %45, %44 : vector<8x1xf32>
    %47 = arith.mulf %41, %46 : vector<8x1xf32>
    %48 = arith.mulf %3, %4 : vector<8x32xf32>
    %cst_20 = arith.constant dense<0.000000e+00> : vector<8xf32>
    %49 = vector.multi_reduction <add>, %48, %cst_20 [1] : vector<8x32xf32> to vector<8xf32>
    %50 = vector.shape_cast %49 : vector<8xf32> to vector<8x1xf32>
    %51 = arith.mulf %3, %5 : vector<8x32xf32>
    %cst_21 = arith.constant dense<0.000000e+00> : vector<8xf32>
    %52 = vector.multi_reduction <add>, %51, %cst_21 [1] : vector<8x32xf32> to vector<8xf32>
    %53 = vector.shape_cast %52 : vector<8xf32> to vector<8x1xf32>
    %54 = arith.mulf %50, %25 : vector<8x1xf32>
    %55 = arith.mulf %54, %36 : vector<8x1xf32>
    %56 = arith.mulf %53, %25 : vector<8x1xf32>
    %57 = arith.mulf %56, %47 : vector<8x1xf32>
    %cst_22 = arith.constant 1.000000e+00 : f32
    %58 = vector.broadcast %cst_22 : f32 to vector<8x1xf32>
    %59 = arith.subf %58, %55 : vector<8x1xf32>
    %cst_23 = arith.constant 1.000000e+00 : f32
    %60 = vector.broadcast %cst_23 : f32 to vector<8x1xf32>
    %61 = arith.subf %60, %57 : vector<8x1xf32>
    %62 = arith.subf %59, %61 : vector<8x1xf32>
    %cst_24 = arith.constant 2.000000e-01 : f32
    %63 = vector.broadcast %cst_24 : f32 to vector<8x1xf32>
    %64 = arith.addf %62, %63 : vector<8x1xf32>
    %cst_25 = arith.constant 0.000000e+00 : f32
    %65 = vector.broadcast %cst_25 : f32 to vector<8x1xf32>
    %66 = arith.maximumf %64, %65 : vector<8x1xf32>
    %c0_26 = arith.constant 0 : index
    %67 = memref.load %arg4[%c0_26] : memref<1xf32, #tpu.memory_space<smem>>
    %68 = vector.shape_cast %66 : vector<8x1xf32> to vector<1x8x1xf32>
    %cst_27 = arith.constant dense<0.000000e+00> : vector<1xf32>
    %69 = vector.multi_reduction <add>, %68, %cst_27 [1, 2] : vector<1x8x1xf32> to vector<1xf32>
    %70 = vector.shape_cast %69 : vector<1xf32> to vector<1x1x1xf32>
    %71 = vector.extract %70[0, 0, 0] : f32 from vector<1x1x1xf32>
    %72 = arith.addf %67, %71 : f32
    %c0_28 = arith.constant 0 : index
    %73 = memref.load %arg4[%c0_28] : memref<1xf32, #tpu.memory_space<smem>>
    memref.store %72, %arg4[%c0_28] : memref<1xf32, #tpu.memory_space<smem>>
    %c0_i32_29 = arith.constant 0 : i32
    %74 = arith.cmpi eq, %arg0, %c0_i32_29 : i32
    %75 = arith.extui %74 : i1 to i32
    %c0_i32_30 = arith.constant 0 : i32
    %76 = arith.cmpi ne, %75, %c0_i32_30 : i32
    scf.if %76 {
      %c0_31 = arith.constant 0 : index
      %77 = memref.load %arg4[%c0_31] : memref<1xf32, #tpu.memory_space<smem>>
      %cst_32 = arith.constant 8.000000e+00 : f32
      %78 = arith.divf %77, %cst_32 : f32
      %c0_33 = arith.constant 0 : index
      %79 = memref.load %arg4[%c0_33] : memref<1xf32, #tpu.memory_space<smem>>
      memref.store %78, %arg4[%c0_33] : memref<1xf32, #tpu.memory_space<smem>>
    } else {
    }
    return
  }
  func.func @transform_0(%arg0: i32) -> (i32, i32) {
    %c0_i32 = arith.constant 0 : i32
    %c0_i32_0 = arith.constant 0 : i32
    return %arg0, %c0_i32 : i32, i32
  }
  func.func @transform_1(%arg0: i32) -> (i32, i32) {
    %c0_i32 = arith.constant 0 : i32
    %c0_i32_0 = arith.constant 0 : i32
    return %arg0, %c0_i32 : i32, i32
  }
  func.func @transform_2(%arg0: i32) -> (i32, i32) {
    %c0_i32 = arith.constant 0 : i32
    %c0_i32_0 = arith.constant 0 : i32
    return %arg0, %c0_i32 : i32, i32
  }
  func.func @transform_3(%arg0: i32) -> i32 {
    %c0_i32 = arith.constant 0 : i32
    %c0_i32_0 = arith.constant 0 : i32
    return %c0_i32 : i32
  }
}

</mosaic_0001>

<llo_original>
// kernel: tpu_custom_call.1
$region0: #{tpu_custom_call.1}
  #allocation0 [shape = 'u32[]', space=smem, size = 0x4, offset = 0x4, fixed_abs, tag = 'smem constant byte address 0x4 - core index']
  #allocation1 [shape = 'u32[144,128]{1,0:T(1,128)}', space=vmem, size = 0x12000, scoped, tag = 'internal scratch']
  %s0 = inlined_call_operand.hbm [shape: f32[8,32], index: 0, kind: input, shape index: {}]
  %s1 = inlined_call_operand.hbm [shape: f32[8,32], index: 1, kind: input, shape index: {}]
  %s2 = inlined_call_operand.hbm [shape: f32[8,32], index: 2, kind: input, shape index: {}]
  %s3 = inlined_call_operand.hbm [shape: f32[1], index: 3, kind: output, shape index: {}]
  %s4 = sld [smem:[#allocation0]]
  $region42: #{tpu_custom_call.1} parent=0
    _
  %s6 = ssub.s32 1, %s4
  %s7 = scalar_select 0, %s6, %s4
  $region1: #{tpu_custom_call.1} parent=0
    #allocation2 [shape = 'u8[4096]{0}', space=vmem, size = 0x1000, scoped, tag = 'input window, operand 0, single buffered']
    #allocation3 [shape = 's32[1]{0}', space=sflag, size = 0x4, scoped, tag = 'scoped memory for tpu_custom_call.1']
    #allocation4 [shape = 's32[1]{0}', space=sflag, size = 0x4, scoped, tag = 'scoped memory for tpu_custom_call.1']
    #allocation5 [shape = 'u8[4096]{0}', space=vmem, size = 0x1000, scoped, tag = 'input window, operand 1, single buffered']
    #allocation6 [shape = 's32[1]{0}', space=sflag, size = 0x4, scoped, tag = 'scoped memory for tpu_custom_call.1']
    #allocation7 [shape = 'u8[4096]{0}', space=vmem, size = 0x1000, scoped, tag = 'input window, operand 2, single buffered']
    #allocation8 [shape = 'u8[512]{0}', space=smem, size = 0x200, scoped, tag = 'output window, operand 0, single buffered']
    %8 = vsyncpa [#allocation3], 0
    %9 = vsyncpa [#allocation6], 0
    %10 = vsyncpa [#allocation4], 0
    // Predicated region
    $region2: #{tpu_custom_call.1} parent=1 // pred_check
      _
    $region3: #{tpu_custom_call.1} parent=1 // pred_check_branch
      %12 = sbr.rel (0) target = $region5
    $region4: #{tpu_custom_call.1} parent=1 // pred_region
      %s14 = ssub.s32 128, 128
      %15 = vsyncadd [#allocation3], %s14
      %s17 = sshll.u32 [#allocation2], 4
      %s18 = int_to_ptr.vmem [resolvable:$true] %s17
      %20 = dma.hbm_to_vmem [thread:$0]  %s0, 128, %s18, [#allocation3]
    $region5: #{tpu_custom_call.1} parent=1 // pred_fallthru
      _
    // Predicated region
    $region6: #{tpu_custom_call.1} parent=1 // pred_check
      _
    $region7: #{tpu_custom_call.1} parent=1 // pred_check_branch
      %22 = sbr.rel (0) target = $region9
    $region8: #{tpu_custom_call.1} parent=1 // pred_region
      %s24 = ssub.s32 128, 128
      %25 = vsyncadd [#allocation6], %s24
      %s27 = sshll.u32 [#allocation5], 4
      %s28 = int_to_ptr.vmem [resolvable:$true] %s27
      %30 = dma.hbm_to_vmem [thread:$0]  %s1, 128, %s28, [#allocation6]
    $region9: #{tpu_custom_call.1} parent=1 // pred_fallthru
      _
    // Predicated region
    $region10: #{tpu_custom_call.1} parent=1 // pred_check
      _
    $region11: #{tpu_custom_call.1} parent=1 // pred_check_branch
      %32 = sbr.rel (0) target = $region13
    $region12: #{tpu_custom_call.1} parent=1 // pred_region
      %s34 = ssub.s32 128, 128
      %35 = vsyncadd [#allocation6], %s34
      %s37 = sshll.u32 [#allocation7], 4
      %s38 = int_to_ptr.vmem [resolvable:$true] %s37
      %40 = dma.hbm_to_vmem [thread:$0]  %s2, 128, %s38, [#allocation6]
    $region13: #{tpu_custom_call.1} parent=1 // pred_fallthru
      _
    // Predicated region
    $region14: #{tpu_custom_call.1} parent=1 // pred_check
      _
    $region15: #{tpu_custom_call.1} parent=1 // pred_check_branch
      %42 = sbr.rel (0) target = $region17
    $region16: #{tpu_custom_call.1} parent=1 // pred_region
      %43 = dma.done [#allocation3], 128
    $region17: #{tpu_custom_call.1} parent=1 // pred_fallthru
      _
    // Predicated region
    $region18: #{tpu_custom_call.1} parent=1 // pred_check
      _
    $region19: #{tpu_custom_call.1} parent=1 // pred_check_branch
      %45 = sbr.rel (0) target = $region21
    $region20: #{tpu_custom_call.1} parent=1 // pred_region
      %46 = dma.done [#allocation6], 128
    $region21: #{tpu_custom_call.1} parent=1 // pred_fallthru
      _
    // Predicated region
    $region22: #{tpu_custom_call.1} parent=1 // pred_check
      _
    $region23: #{tpu_custom_call.1} parent=1 // pred_check_branch
      %48 = sbr.rel (0) target = $region25
    $region24: #{tpu_custom_call.1} parent=1 // pred_region
      %49 = dma.done [#allocation6], 128
    $region25: #{tpu_custom_call.1} parent=1 // pred_fallthru
      _
    %p50 = scmp.eq.s32.totalorder 0, 0
    // Predicated region
    $region26: #{tpu_custom_call.1} parent=1 // pred_check
      %p51 = pneg %p50
    $region27: #{tpu_custom_call.1} parent=1 // pred_check_branch
      %53 = sbr.rel (%p51) target = $region29
    $region28: #{tpu_custom_call.1} parent=1 // pred_region
      %s54 = scalar_lea.smem [#allocation8], 0
      %55 = sst [smem:[%s54]] 0.0
    $region29: #{tpu_custom_call.1} parent=1 // pred_fallthru
      _
    %v56 = vld [vmem:[#allocation2] sm:$0xff]
    %v57 = vld [vmem:[#allocation5] sm:$0xff]
    %v58 = vld [vmem:[#allocation7] sm:$0xff]
    %v59 = vmul.f32 %v56, %v56
    %vm60 = vcmask 261120
    %v61 = vsel %vm60, %v59, 0.0
    %62 = vadd.xlane.f32.xlu0 %v61
    %v63 = vpop.xlane.xlu0 %62
    %v64 = vmul.f32 %v57, %v57
    %v65 = vsel %vm60, %v64, 0.0
    %66 = vadd.xlane.f32.xlu0 %v65
    %v67 = vpop.xlane.xlu0 %66
    %v68 = vmul.f32 %v58, %v58
    %v69 = vsel %vm60, %v68, 0.0
    %70 = vadd.xlane.f32.xlu0 %v69
    %v71 = vpop.xlane.xlu0 %70
    %v72 = vrsqrt.pop %v63
    %v73 = vmul.f32 %v63, %v72
    %vm74 = vcmp.eq.f32.partialorder %v63, inf
    %v75 = vsel %vm74, %v63, %v73
    %vm76 = vcmp.eq.f32.partialorder %v63, 0.0
    %v77 = vand.u32 %v63, 2147483648
    %v78 = vsel %vm76, %v77, %v75
    %v79 = vmax.f32 %v78, 1e-12
    %v80 = vrcp.pop %v79
    %v81 = vmul.f32 1.0, %v80
    %v82 = vmul.f32 %v78, %v81
    %v83 = vmax.f32 %v82, 1e-08
    %v84 = vrcp.pop %v83
    %v85 = vmul.f32 1.0, %v84
    %v86 = vmul.f32 %v81, %v85
    %v87 = vrsqrt.pop %v67
    %v88 = vmul.f32 %v67, %v87
    %vm89 = vcmp.eq.f32.partialorder %v67, inf
    %v90 = vsel %vm89, %v67, %v88
    %vm91 = vcmp.eq.f32.partialorder %v67, 0.0
    %v92 = vand.u32 %v67, 2147483648
    %v93 = vsel %vm91, %v92, %v90
    %v94 = vmax.f32 %v93, 1e-12
    %v95 = vrcp.pop %v94
    %v96 = vmul.f32 1.0, %v95
    %v97 = vmul.f32 %v93, %v96
    %v98 = vmax.f32 %v97, 1e-08
    %v99 = vrcp.pop %v98
    %v100 = vmul.f32 1.0, %v99
    %v101 = vmul.f32 %v96, %v100
    %v102 = vrsqrt.pop %v71
    %v103 = vmul.f32 %v71, %v102
    %vm104 = vcmp.eq.f32.partialorder %v71, inf
    %v105 = vsel %vm104, %v71, %v103
    %vm106 = vcmp.eq.f32.partialorder %v71, 0.0
    %v107 = vand.u32 %v71, 2147483648
    %v108 = vsel %vm106, %v107, %v105
    %v109 = vmax.f32 %v108, 1e-12
    %v110 = vrcp.pop %v109
    %v111 = vmul.f32 1.0, %v110
    %v112 = vmul.f32 %v108, %v111
    %v113 = vmax.f32 %v112, 1e-08
    %v114 = vrcp.pop %v113
    %v115 = vmul.f32 1.0, %v114
    %v116 = vmul.f32 %v111, %v115
    %v117 = vmul.f32 %v56, %v57
    %v118 = vsel %vm60, %v117, 0.0
    %119 = vadd.xlane.f32.xlu0 %v118
    %v120 = vpop.xlane.xlu0 %119
    %v121 = vmul.f32 %v56, %v58
    %v122 = vsel %vm60, %v121, 0.0
    %123 = vadd.xlane.f32.xlu0 %v122
    %v124 = vpop.xlane.xlu0 %123
    %v125 = vmul.f32 %v120, %v86
    %v126 = vmul.f32 %v125, %v101
    %v127 = vmul.f32 %v124, %v86
    %v128 = vmul.f32 %v127, %v116
    %v129 = vsub.f32 1.0, %v126
    %v130 = vsub.f32 1.0, %v128
    %v131 = vsub.f32 %v129, %v130
    %v132 = vadd.f32 %v131, 0.2
    %v133 = vmax.f32 %v132, 0.0
    %s134 = sld [smem:[#allocation8]]
    %vm135 = vcmask 7168
    %v136 = vsel %vm135, %v133, 0.0
    %137 = vadd.xlane.f32.xlu0 %v136
    %v138 = vpop.xlane.xlu0 %137
    %v139 = vrot.slane %v138, 4
    %v140 = vadd.f32 %v138, %v139
    %v141 = vrot.slane %v140, 2
    %v142 = vadd.f32 %v140, %v141
    %v143 = vrot.slane %v142, 1
    %v144 = vadd.f32 %v142, %v143
    %s145 = vtos %v144
    %s146 = sadd.f32 %s134, %s145
    %s147 = scalar_lea.smem [#allocation8], 0
    %148 = sst [smem:[%s147]] %s146
    // Predicated region
    $region30: #{tpu_custom_call.1} parent=1 // pred_check
      %p149 = pneg %p50
    $region31: #{tpu_custom_call.1} parent=1 // pred_check_branch
      %151 = sbr.rel (%p149) target = $region33
    $region32: #{tpu_custom_call.1} parent=1 // pred_region
      %s152 = sld [smem:[#allocation8]]
      %v153 = vrcp.pop 8.0
      %s154 = vtos %v153
      %s155 = smul.f32 %s152, %s154
      %156 = sst [smem:[%s147]] %s155
    $region33: #{tpu_custom_call.1} parent=1 // pred_fallthru
      _
    // Predicated region
    $region34: #{tpu_custom_call.1} parent=1 // pred_check
      _
    $region35: #{tpu_custom_call.1} parent=1 // pred_check_branch
      %158 = sbr.rel (0) target = $region37
    $region36: #{tpu_custom_call.1} parent=1 // pred_region
      %s160 = ssub.s32 16, 16
      %161 = vsyncadd [#allocation4], %s160
      %164 = dma.smem_to_hbm [#allocation8], 16, %s3, [#allocation4]
    $region37: #{tpu_custom_call.1} parent=1 // pred_fallthru
      _
    // Predicated region
    $region38: #{tpu_custom_call.1} parent=1 // pred_check
      _
    $region39: #{tpu_custom_call.1} parent=1 // pred_check_branch
      %166 = sbr.rel (0) target = $region41
    $region40: #{tpu_custom_call.1} parent=1 // pred_region
      %167 = dma.done [#allocation4], 16
    $region41: #{tpu_custom_call.1} parent=1 // pred_fallthru
      _
    %168 = sfence
    %169 = vsyncpa [#allocation3], 1
    %170 = vsyncpa [#allocation6], 1
    %171 = vsyncpa [#allocation4], 1

</llo_original>
